<compile_context>
chip_gen: v6e
topology: v6e:2x2x1
jax: 0.10.0
libtpu: 0.0.40
codegen_flags: <defaults>
</compile_context>

<pallas_src>
import functools

import jax
import jax.numpy as jnp
from jax.experimental import pallas as pl
from jax.experimental.pallas import tpu as pltpu

_LANE = 128


def _round_up(x: int, m: int) -> int:
    return ((x + m - 1) // m) * m


def _mlp_kernel(n_layers, matmul_dtype, elementwise_dtype, *refs):
    """One batch tile of the MLP forward in transposed (features, batch) layout.

    refs = (obs_ref(ob_dim, TB),
            W0(H, ob_dim), b0(H, 1), ..., W_{n-1}(H, H), b_{n-1}(H, 1),
            w_head(H, 1), b_head(1, 1),
            out_ref(1, TB))
    """
    obs_ref = refs[0]
    out_ref = refs[-1]
    p = refs[1:-1]  # alternating W, b (already pre-cast in the wrapper)

    h = obs_ref[...]  # (ob_dim, TB), already matmul_dtype -- no in-kernel cast
    for layer in range(n_layers):
        w = p[2 * layer][...]          # (H_out, H_in), matmul_dtype
        b = p[2 * layer + 1][...]      # (H_out, 1),   elementwise_dtype
        acc = jnp.dot(w, h, preferred_element_type=jnp.float32)    # MXU, f32 acc
        h = jnp.tanh(acc.astype(elementwise_dtype) + b)            # VPU + EUP, lane-dense
        if layer + 1 < n_layers and h.dtype != jnp.dtype(matmul_dtype):
            h = h.astype(matmul_dtype)  # only when elementwise/matmul dtypes differ

    # Head Linear(H, 1), identity activation: broadcast-multiply + sublane
    # reduce in f32, written directly as the lane-dense (1, TB) output row.
    w_head = p[2 * n_layers][...]       # (H, 1) f32
    b_head = p[2 * n_layers + 1][...]   # (1, 1) f32
    v = jnp.sum(h.astype(jnp.float32) * w_head, axis=0, keepdims=True)  # (1, TB)
    out_ref[...] = (v + b_head).astype(out_ref.dtype)


def value_critic_forward(obs, params, n_layers, *, tile_batch=2048,
                         matmul_dtype=jnp.bfloat16, elementwise_dtype=None):
    """ValueCritic forward: returns network(obs).squeeze() as shape (batch,).

    obs:    (batch, ob_dim) float32
    params: list of (W, b); W is (in_features, out_features) (the transpose of
            torch.nn.Linear.weight), b is (1, out) or (out,).
    elementwise_dtype: dtype for bias-add + tanh. Defaults to matmul_dtype
            (bf16 fast path for v6e/v7x); pass jnp.float32 on v5e.
    """
    if elementwise_dtype is None:
        elementwise_dtype = matmul_dtype
    batch, ob_dim = obs.shape
    layer_size = params[0][0].shape[1]
    assert tile_batch % _LANE == 0, "tile_batch must be a multiple of 128"

    # --- batch tiling: lane-aligned tiles; >= 2 grid steps whenever batch > 128
    #     so v7x's two TensorCores both get work (no effect on v5e/v6e). ---
    min_pad = _round_up(batch, _LANE)
    if min_pad <= _LANE:
        grid_n, tb = 1, min_pad
    else:
        grid_n = max(2, pl.cdiv(min_pad, tile_batch))
        tb = _round_up(pl.cdiv(min_pad, grid_n), _LANE)
    padded = grid_n * tb

    # --- layout plumbing (runs once in the wrapper, not per grid step) ---
    # Transposed, lane-dense obs: (ob_dim, padded_batch), pre-cast to matmul dtype.
    obs_t = jnp.pad(obs.T, ((0, 0), (0, padded - batch))).astype(matmul_dtype)

    # Hidden weights in native PyTorch (out, in) layout, pre-cast to matmul
    # dtype; biases as (out, 1) columns in elementwise dtype; head kept f32.
    flat_params = []
    for idx, (w, b) in enumerate(params):
        if idx == n_layers:  # head layer Linear(H, 1)
            flat_params.append(jnp.reshape(w, (-1, 1)).astype(jnp.float32))   # (H, 1)
            flat_params.append(jnp.reshape(b, (1, 1)).astype(jnp.float32))    # (1, 1)
        else:
            flat_params.append(jnp.transpose(w).astype(matmul_dtype))         # (out, in)
            flat_params.append(jnp.reshape(b, (-1, 1)).astype(elementwise_dtype))

    # obs streams one batch tile per grid step; params keep a constant block
    # index -> DMA'd once, resident in VMEM across the whole grid.
    in_specs = [pl.BlockSpec((ob_dim, tb), lambda i: (0, i))]
    for fp in flat_params:
        in_specs.append(pl.BlockSpec(fp.shape, lambda i: (0, 0)))
    out_spec = pl.BlockSpec((1, tb), lambda i: (0, i))   # lane-dense output row

    param_bytes = sum(int(fp.size) * fp.dtype.itemsize for fp in flat_params)
    flops = 2 * padded * (ob_dim * layer_size
                          + (n_layers - 1) * layer_size * layer_size
                          + layer_size)
    cost = pl.CostEstimate(
        flops=int(flops),
        transcendentals=int(padded * n_layers * layer_size),
        bytes_accessed=int(obs_t.size) * obs_t.dtype.itemsize + padded * 4 + param_bytes,
    )

    # Only raise the scoped-VMEM limit if we would approach v5e's 16 MiB default
    # (double-buffered obs/out tiles + resident params + intermediate headroom).
    work = max(layer_size, ob_dim) * tb
    vmem_est = (2 * ob_dim * tb * obs_t.dtype.itemsize
                + 2 * tb * 4
                + 2 * param_bytes
                + 6 * work * 4)
    cp_kwargs = dict(dimension_semantics=("parallel",))
    if vmem_est > 12 * (1 << 20):
        cp_kwargs["vmem_limit_bytes"] = int(min(60 << 20, 2 * vmem_est))

    kernel = functools.partial(_mlp_kernel, n_layers, matmul_dtype, elementwise_dtype)

    out_row = pl.pallas_call(
        kernel,
        grid=(grid_n,),
        in_specs=in_specs,
        out_specs=out_spec,
        out_shape=jax.ShapeDtypeStruct((1, padded), jnp.float32),
        compiler_params=pltpu.CompilerParams(**cp_kwargs),
        cost_estimate=cost,
    )(obs_t, *flat_params)

    # PyTorch .squeeze(): (batch, 1) -> (batch,); drop batch padding.
    return out_row[0, :batch]


def init_params(key, ob_dim, n_layers, layer_size):
    """Deterministic synthetic parameter init (shapes match build_mlp)."""
    params = []
    dims = [ob_dim] + [layer_size] * n_layers + [1]
    for i in range(len(dims) - 1):
        key, kw, kb = jax.random.split(key, 3)
        scale = 1.0 / jnp.sqrt(jnp.float32(dims[i]))
        w = jax.random.uniform(kw, (dims[i], dims[i + 1]), jnp.float32,
                               minval=-scale, maxval=scale)
        b = jax.random.uniform(kb, (1, dims[i + 1]), jnp.float32,
                               minval=-scale, maxval=scale)
        params.append((w, b))
    return params


def reference_forward(obs, params, n_layers):
    """Pure-JAX f32 reference for correctness checks."""
    h = obs
    for layer in range(n_layers):
        w, b = params[layer]
        h = jnp.tanh(h @ w + b)
    w, b = params[n_layers]
    return jnp.squeeze(h @ w + b, axis=-1)


# TODO(synk): ValueCritic.update() (Adam step + MSE backward) is training-side
# optimizer logic, not part of forward(); it is intentionally not kernelized.


if __name__ == "__main__":
    batch, ob_dim, n_layers, layer_size = 8, 16, 2, 32

    key = jax.random.PRNGKey(0)
    key, k_obs = jax.random.split(key)
    obs = jax.random.normal(k_obs, (batch, ob_dim), jnp.float32)
    params = init_params(key, ob_dim, n_layers, layer_size)
    ref = reference_forward(obs, params, n_layers)

    # Exact path (f32 MXU operands + f32 elementwise) — tight tolerance.
    v_f32 = value_critic_forward(obs, params, n_layers, matmul_dtype=jnp.float32)
    v_f32 = jax.block_until_ready(v_f32)
    assert v_f32.shape == (batch,)
    assert jnp.allclose(v_f32, ref, atol=1e-5, rtol=1e-5), (v_f32, ref)

    # Fast path: bf16 MXU operands + bf16 bias/tanh (v6e / v7x default).
    v_bf16 = value_critic_forward(obs, params, n_layers, matmul_dtype=jnp.bfloat16)
    v_bf16 = jax.block_until_ready(v_bf16)
    assert v_bf16.shape == (batch,)
    assert jnp.allclose(v_bf16, ref, atol=5e-2, rtol=5e-2), (v_bf16, ref)

    # v5e-style path: bf16 MXU operands, f32 bias/tanh (no bf16 VPU/EUP there).
    v_mixed = value_critic_forward(obs, params, n_layers,
                                   matmul_dtype=jnp.bfloat16,
                                   elementwise_dtype=jnp.float32)
    v_mixed = jax.block_until_ready(v_mixed)
    assert jnp.allclose(v_mixed, ref, atol=5e-2, rtol=5e-2), (v_mixed, ref)

    # Multi-tile / pipelined path with a non-tile-multiple batch (grid_n = 4).
    big_batch = 1000
    key, k_big = jax.random.split(key)
    big_obs = jax.random.normal(k_big, (big_batch, ob_dim), jnp.float32)
    big_ref = reference_forward(big_obs, params, n_layers)
    big_f32 = value_critic_forward(big_obs, params, n_layers,
                                   tile_batch=256, matmul_dtype=jnp.float32)
    big_f32 = jax.block_until_ready(big_f32)
    assert big_f32.shape == (big_batch,)
    assert jnp.allclose(big_f32, big_ref, atol=1e-5, rtol=1e-5)

    # Default tile_batch with batch > 128: forced grid_n=2 split (v7x 2-TC path).
    big_bf16 = value_critic_forward(big_obs, params, n_layers,
                                    matmul_dtype=jnp.bfloat16)
    big_bf16 = jax.block_until_ready(big_bf16)
    assert big_bf16.shape == (big_batch,)
    assert jnp.allclose(big_bf16, big_ref, atol=5e-2, rtol=5e-2)

    print("KERNEL_OK")
</pallas_src>

<mosaic_0001>
module attributes {stable_mosaic.version = 11 : i64} {
  func.func @_mlp_kernel(%arg0: i32, %arg1: memref<16x128xf32, #tpu.memory_space<vmem>>, %arg2: memref<32x16xf32, #tpu.memory_space<vmem>>, %arg3: memref<32x1xf32, #tpu.memory_space<vmem>>, %arg4: memref<32x32xf32, #tpu.memory_space<vmem>>, %arg5: memref<32x1xf32, #tpu.memory_space<vmem>>, %arg6: memref<32x1xf32, #tpu.memory_space<vmem>>, %arg7: memref<1x1xf32, #tpu.memory_space<vmem>>, %arg8: memref<1x128xf32, #tpu.memory_space<vmem>>) attributes {dimension_semantics = [#tpu.dimension_semantics<parallel>], iteration_bounds = array<i64: 1>, scalar_prefetch = 0 : i64, scratch_operands = 0 : i64, tpu.core_type = #tpu.core_type<tc>, window_params = [{transform_indices = @transform_0, window_bounds = array<i64: 16, 128>}, {pipeline_mode = #tpu.pipeline_mode<synchronous>, transform_indices = @transform_1, window_bounds = array<i64: 32, 16>}, {pipeline_mode = #tpu.pipeline_mode<synchronous>, transform_indices = @transform_2, window_bounds = array<i64: 32, 1>}, {pipeline_mode = #tpu.pipeline_mode<synchronous>, transform_indices = @transform_3, window_bounds = array<i64: 32, 32>}, {pipeline_mode = #tpu.pipeline_mode<synchronous>, transform_indices = @transform_4, window_bounds = array<i64: 32, 1>}, {pipeline_mode = #tpu.pipeline_mode<synchronous>, transform_indices = @transform_5, window_bounds = array<i64: 32, 1>}, {pipeline_mode = #tpu.pipeline_mode<synchronous>, transform_indices = @transform_6, window_bounds = array<i64: 1, 1>}, {transform_indices = @transform_7, window_bounds = array<i64: 1, 128>}]} {
    %c0 = arith.constant 0 : index
    %c0_0 = arith.constant 0 : index
    %0 = vector.load %arg1[%c0, %c0_0] : memref<16x128xf32, #tpu.memory_space<vmem>>, vector<16x128xf32>
    %c0_1 = arith.constant 0 : index
    %c0_2 = arith.constant 0 : index
    %1 = vector.load %arg2[%c0_1, %c0_2] : memref<32x16xf32, #tpu.memory_space<vmem>>, vector<32x16xf32>
    %c0_3 = arith.constant 0 : index
    %c0_4 = arith.constant 0 : index
    %2 = vector.load %arg3[%c0_3, %c0_4] : memref<32x1xf32, #tpu.memory_space<vmem>>, vector<32x1xf32>
    %cst = arith.constant dense<0.000000e+00> : vector<32x128xf32>
    %3 = tpu.matmul %1, %0, %cst {dimension_numbers = #tpu.dot_dimension_numbers<[1], [0], [0], [1], [0, 0, 1, 1], [], []>} : vector<32x16xf32>, vector<16x128xf32>, vector<32x128xf32> -> vector<32x128xf32>
    %4 = vector.broadcast %2 : vector<32x1xf32> to vector<32x128xf32>
    %5 = arith.addf %3, %4 : vector<32x128xf32>
    %6 = math.tanh %5 : vector<32x128xf32>
    %c0_5 = arith.constant 0 : index
    %c0_6 = arith.constant 0 : index
    %7 = vector.load %arg4[%c0_5, %c0_6] : memref<32x32xf32, #tpu.memory_space<vmem>>, vector<32x32xf32>
    %c0_7 = arith.constant 0 : index
    %c0_8 = arith.constant 0 : index
    %8 = vector.load %arg5[%c0_7, %c0_8] : memref<32x1xf32, #tpu.memory_space<vmem>>, vector<32x1xf32>
    %cst_9 = arith.constant dense<0.000000e+00> : vector<32x128xf32>
    %9 = tpu.matmul %7, %6, %cst_9 {dimension_numbers = #tpu.dot_dimension_numbers<[1], [0], [0], [1], [0, 0, 1, 1], [], []>} : vector<32x32xf32>, vector<32x128xf32>, vector<32x128xf32> -> vector<32x128xf32>
    %10 = vector.broadcast %8 : vector<32x1xf32> to vector<32x128xf32>
    %11 = arith.addf %9, %10 : vector<32x128xf32>
    %12 = math.tanh %11 : vector<32x128xf32>
    %c0_10 = arith.constant 0 : index
    %c0_11 = arith.constant 0 : index
    %13 = vector.load %arg6[%c0_10, %c0_11] : memref<32x1xf32, #tpu.memory_space<vmem>>, vector<32x1xf32>
    %c0_12 = arith.constant 0 : index
    %c0_13 = arith.constant 0 : index
    %14 = vector.load %arg7[%c0_12, %c0_13] : memref<1x1xf32, #tpu.memory_space<vmem>>, vector<1x1xf32>
    %15 = vector.broadcast %13 : vector<32x1xf32> to vector<32x128xf32>
    %16 = arith.mulf %12, %15 : vector<32x128xf32>
    %cst_14 = arith.constant dense<0.000000e+00> : vector<128xf32>
    %17 = vector.multi_reduction <add>, %16, %cst_14 [0] : vector<32x128xf32> to vector<128xf32>
    %18 = vector.shape_cast %17 : vector<128xf32> to vector<1x128xf32>
    %19 = vector.broadcast %14 : vector<1x1xf32> to vector<1x128xf32>
    %20 = arith.addf %18, %19 : vector<1x128xf32>
    %c0_15 = arith.constant 0 : index
    %c0_16 = arith.constant 0 : index
    %21 = vector.load %arg8[%c0_15, %c0_16] : memref<1x128xf32, #tpu.memory_space<vmem>>, vector<1x128xf32>
    tpu.vector_store %arg8[%c0_15, %c0_16], %20 {strides = array<i32>} : memref<1x128xf32, #tpu.memory_space<vmem>>, vector<1x128xf32>,
    return
  }
  func.func @transform_0(%arg0: i32) -> (i32, i32) {
    %c0_i32 = arith.constant 0 : i32
    %c0_i32_0 = arith.constant 0 : i32
    return %c0_i32, %arg0 : i32, i32
  }
  func.func @transform_1(%arg0: i32) -> (i32, i32) {
    %c0_i32 = arith.constant 0 : i32
    %c0_i32_0 = arith.constant 0 : i32
    %c0_i32_1 = arith.constant 0 : i32
    return %c0_i32, %c0_i32_0 : i32, i32
  }
  func.func @transform_2(%arg0: i32) -> (i32, i32) {
    %c0_i32 = arith.constant 0 : i32
    %c0_i32_0 = arith.constant 0 : i32
    %c0_i32_1 = arith.constant 0 : i32
    return %c0_i32, %c0_i32_0 : i32, i32
  }
  func.func @transform_3(%arg0: i32) -> (i32, i32) {
    %c0_i32 = arith.constant 0 : i32
    %c0_i32_0 = arith.constant 0 : i32
    %c0_i32_1 = arith.constant 0 : i32
    return %c0_i32, %c0_i32_0 : i32, i32
  }
  func.func @transform_4(%arg0: i32) -> (i32, i32) {
    %c0_i32 = arith.constant 0 : i32
    %c0_i32_0 = arith.constant 0 : i32
    %c0_i32_1 = arith.constant 0 : i32
    return %c0_i32, %c0_i32_0 : i32, i32
  }
  func.func @transform_5(%arg0: i32) -> (i32, i32) {
    %c0_i32 = arith.constant 0 : i32
    %c0_i32_0 = arith.constant 0 : i32
    %c0_i32_1 = arith.constant 0 : i32
    return %c0_i32, %c0_i32_0 : i32, i32
  }
  func.func @transform_6(%arg0: i32) -> (i32, i32) {
    %c0_i32 = arith.constant 0 : i32
    %c0_i32_0 = arith.constant 0 : i32
    %c0_i32_1 = arith.constant 0 : i32
    return %c0_i32, %c0_i32_0 : i32, i32
  }
  func.func @transform_7(%arg0: i32) -> (i32, i32) {
    %c0_i32 = arith.constant 0 : i32
    %c0_i32_0 = arith.constant 0 : i32
    return %c0_i32, %arg0 : i32, i32
  }
}

</mosaic_0001>

<llo_original>
// kernel: tpu_custom_call.1
$region0: #{tpu_custom_call.1}
  #allocation0 [shape = 'u32[]', space=smem, size = 0x4, offset = 0x4, fixed_abs, tag = 'smem constant byte address 0x4 - core index']
  #allocation1 [shape = 'u32[144,128]{1,0:T(1,128)}', space=vmem, size = 0x12000, scoped, tag = 'internal scratch']
  #allocation2 [shape = 'f32[1,1]{1,0:T(1,128)S(1)}', space=vmem, size = 0x200, scoped, tag = 'scoped memory for tpu_custom_call.1']
  %s0 = inlined_call_operand.vmem [shape: f32[16,128], index: 0, kind: input, shape index: {}]
  %s1 = inlined_call_operand.vmem [shape: f32[32,16], index: 1, kind: input, shape index: {}]
  %s2 = inlined_call_operand.vmem [shape: f32[32,1], index: 2, kind: input, shape index: {}]
  %s3 = inlined_call_operand.vmem [shape: f32[32,32], index: 3, kind: input, shape index: {}]
  %s4 = inlined_call_operand.vmem [shape: f32[32,1], index: 4, kind: input, shape index: {}]
  %s5 = inlined_call_operand.vmem [shape: f32[32,1], index: 5, kind: input, shape index: {}]
  %s6 = inlined_call_operand.<no memory space> [shape: f32[1,1], index: 6, kind: input, shape index: {}]
  %s7 = inlined_call_operand.hbm [shape: f32[1,128], index: 7, kind: output, shape index: {}]
  %s8 = sld [smem:[#allocation0]]
  $region38: #{tpu_custom_call.1} parent=0
    _
  %s10 = ssub.s32 1, %s8
  %s11 = scalar_select 0, %s10, %s8
  %v12 = vstv %s6
  %13 = vst [vmem:[#allocation2] sm:$0x1] %v12
  $region1: #{tpu_custom_call.1} parent=0
    #allocation3 [shape = 'u8[512]{0}', space=vmem, size = 0x400, scoped, tag = 'output window, operand 0, single buffered']
    #allocation4 [shape = 's32[1]{0}', space=sflag, size = 0x4, scoped, tag = 'scoped memory for tpu_custom_call.1']
    %14 = vsyncpa [#allocation4], 0
    // Predicated region
    $region2: #{tpu_custom_call.1} parent=1 // pred_check
      _
    $region3: #{tpu_custom_call.1} parent=1 // pred_check_branch
      %16 = sbr.rel (0) target = $region5
    $region4: #{tpu_custom_call.1} parent=1 // pred_region
      _
    $region5: #{tpu_custom_call.1} parent=1 // pred_fallthru
      _
    // Predicated region
    $region6: #{tpu_custom_call.1} parent=1 // pred_check
      _
    $region7: #{tpu_custom_call.1} parent=1 // pred_check_branch
      %18 = sbr.rel (0) target = $region9
    $region8: #{tpu_custom_call.1} parent=1 // pred_region
      _
    $region9: #{tpu_custom_call.1} parent=1 // pred_fallthru
      _
    // Predicated region
    $region10: #{tpu_custom_call.1} parent=1 // pred_check
      _
    $region11: #{tpu_custom_call.1} parent=1 // pred_check_branch
      %20 = sbr.rel (0) target = $region13
    $region12: #{tpu_custom_call.1} parent=1 // pred_region
      _
    $region13: #{tpu_custom_call.1} parent=1 // pred_fallthru
      _
    // Predicated region
    $region14: #{tpu_custom_call.1} parent=1 // pred_check
      _
    $region15: #{tpu_custom_call.1} parent=1 // pred_check_branch
      %22 = sbr.rel (0) target = $region17
    $region16: #{tpu_custom_call.1} parent=1 // pred_region
      _
    $region17: #{tpu_custom_call.1} parent=1 // pred_fallthru
      _
    // Predicated region
    $region18: #{tpu_custom_call.1} parent=1 // pred_check
      _
    $region19: #{tpu_custom_call.1} parent=1 // pred_check_branch
      %24 = sbr.rel (0) target = $region21
    $region20: #{tpu_custom_call.1} parent=1 // pred_region
      _
    $region21: #{tpu_custom_call.1} parent=1 // pred_fallthru
      _
    // Predicated region
    $region22: #{tpu_custom_call.1} parent=1 // pred_check
      _
    $region23: #{tpu_custom_call.1} parent=1 // pred_check_branch
      %26 = sbr.rel (0) target = $region25
    $region24: #{tpu_custom_call.1} parent=1 // pred_region
      _
    $region25: #{tpu_custom_call.1} parent=1 // pred_fallthru
      _
    // Predicated region
    $region26: #{tpu_custom_call.1} parent=1 // pred_check
      _
    $region27: #{tpu_custom_call.1} parent=1 // pred_check_branch
      %28 = sbr.rel (0) target = $region29
    $region28: #{tpu_custom_call.1} parent=1 // pred_region
      _
    $region29: #{tpu_custom_call.1} parent=1 // pred_fallthru
      _
    %v29 = vld [vmem:[%s0] sm:$0xff]
    %v30 = vld [vmem:[%s0 + $0x8] sm:$0xff]
    %v31 = vld [vmem:[%s1] sm:$0xff]
    %v32 = vld [vmem:[%s1 + $0x8] sm:$0xff]
    %v33 = vld [vmem:[%s1 + $0x10] sm:$0xff]
    %v34 = vld [vmem:[%s1 + $0x18] sm:$0xff]
    %v35 = vld [vmem:[%s2] sm:$0xff]
    %v36 = vld [vmem:[%s2 + $0x8] sm:$0xff]
    %v37 = vld [vmem:[%s2 + $0x10] sm:$0xff]
    %v38 = vld [vmem:[%s2 + $0x18] sm:$0xff]
    %40 = vset.pattern.permute.xlu0 0
    %41 = vperm.xlu0 %40, %v35
    %v42 = vpop.permute.xlu0 %41
    %45 = vset.pattern.permute.xlu0 0
    %46 = vperm.xlu0 %45, %v36
    %v47 = vpop.permute.xlu0 %46
    %50 = vset.pattern.permute.xlu0 0
    %51 = vperm.xlu0 %50, %v37
    %v52 = vpop.permute.xlu0 %51
    %55 = vset.pattern.permute.xlu0 0
    %56 = vperm.xlu0 %55, %v38
    %v57 = vpop.permute.xlu0 %56
    %vm59 = vcmask 130048
    %v61 = vsel %vm59, %v31, 0
    %v64 = vsel %vm59, %v32, 0
    %v67 = vsel %vm59, %v33, 0
    %v70 = vsel %vm59, %v34, 0
    %72 = vmatprep.subr.mxu0 0.0
    %73 = vmatpush1.msra.mxu0 0.0
    %74 = vmatprep.subr.mxu0 0.0
    %75 = vmatpush1.msra.mxu0 0.0
    %76 = vmatprep.subr.mxu0 0.0
    %77 = vmatpush1.msra.mxu0 0.0
    %78 = vmatprep.subr.mxu0 0.0
    %79 = vmatpush1.msra.mxu0 0.0
    %80 = vmatprep.subr.mxu0 0.0
    %81 = vmatpush1.msra.mxu0 0.0
    %82 = vmatprep.subr.mxu0 0.0
    %83 = vmatpush1.msra.mxu0 0.0
    %84 = vmatprep.subr.mxu0 0.0
    %85 = vmatpush1.msra.mxu0 0.0
    %86 = vmatprep.subr.mxu0 0.0
    %87 = vmatpush1.msra.mxu0 0.0
    %88 = vmatprep.subr.mxu0 0.0
    %89 = vmatpush1.msra.mxu0 0.0
    %90 = vmatprep.subr.mxu0 0.0
    %91 = vmatpush1.msra.mxu0 0.0
    %92 = vmatprep.subr.mxu0 0.0
    %93 = vmatpush1.msra.mxu0 0.0
    %94 = vmatprep.subr.mxu0 0.0
    %95 = vmatpush1.msra.mxu0 0.0
    %96 = vmatprep.subr.mxu0 0.0
    %97 = vmatpush1.msra.mxu0 0.0
    %98 = vmatprep.subr.mxu0 0.0
    %99 = vmatpush1.msra.mxu0 0.0
    %100 = vmatprep.subr.mxu0 0.0
    %101 = vmatpush1.msra.mxu0 %v30
    %102 = vmatprep.subr.mxu0 0.0
    %103 = vmatpush1.msra.mxu0 %v29
    %104 = vmatprep.subr.mxu0 0.0
    %105 = vmatpush2.msra.mxu0 0.0
    %106 = vmatprep.subr.mxu0 0.0
    %107 = vmatpush2.msra.mxu0 0.0
    %108 = vmatprep.subr.mxu0 0.0
    %109 = vmatpush2.msra.mxu0 0.0
    %110 = vmatprep.subr.mxu0 0.0
    %111 = vmatpush2.msra.mxu0 0.0
    %112 = vmatprep.subr.mxu0 0.0
    %113 = vmatpush2.msra.mxu0 0.0
    %114 = vmatprep.subr.mxu0 0.0
    %115 = vmatpush2.msra.mxu0 0.0
    %116 = vmatprep.subr.mxu0 0.0
    %117 = vmatpush2.msra.mxu0 0.0
    %118 = vmatprep.subr.mxu0 0.0
    %119 = vmatpush2.msra.mxu0 0.0
    %120 = vmatprep.subr.mxu0 0.0
    %121 = vmatpush2.msra.mxu0 0.0
    %122 = vmatprep.subr.mxu0 0.0
    %123 = vmatpush2.msra.mxu0 0.0
    %124 = vmatprep.subr.mxu0 0.0
    %125 = vmatpush2.msra.mxu0 0.0
    %126 = vmatprep.subr.mxu0 0.0
    %127 = vmatpush2.msra.mxu0 0.0
    %128 = vmatprep.subr.mxu0 0.0
    %129 = vmatpush2.msra.mxu0 0.0
    %130 = vmatprep.subr.mxu0 0.0
    %131 = vmatpush2.msra.mxu0 0.0
    %132 = vmatprep.subr.mxu0 0.0
    %133 = vmatpush2.msra.mxu0 0.0
    %134 = vmatprep.subr.mxu0 0.0
    %135 = vmatpush2.msra.mxu0 0.0
    %136 = vmatprep.mubr.f32.mxu0 0.0
    %137 = vmatmul.mubr.f32.gmra.mxu0 %v61
    %v138 = vpop.f32.mrf.mxu0
    %v139 = vadd.f32 %v42, %v138
    %v140 = vpop.f32.mrf.mxu0
    %141 = vmatprep.mubr.f32.mxu0 0.0
    %142 = vmatmul.mubr.f32.gmra.mxu0 %v64
    %v143 = vpop.f32.mrf.mxu0
    %v144 = vadd.f32 %v47, %v143
    %v145 = vpop.f32.mrf.mxu0
    %146 = vmatprep.mubr.f32.mxu0 0.0
    %147 = vmatmul.mubr.f32.gmra.mxu0 %v67
    %v148 = vpop.f32.mrf.mxu0
    %v149 = vadd.f32 %v52, %v148
    %v150 = vpop.f32.mrf.mxu0
    %151 = vmatprep.mubr.f32.mxu0 0.0
    %152 = vmatmul.mubr.f32.gmra.mxu0 %v70
    %v153 = vpop.f32.mrf.mxu0
    %v154 = vadd.f32 %v57, %v153
    %v155 = vpop.f32.mrf.mxu0
    %156 = vdwg.mxu0
    %v157 = vtanh.pop %v139
    %v158 = vtanh.pop %v144
    %v159 = vtanh.pop %v149
    %v160 = vtanh.pop %v154
    %v161 = vld [vmem:[%s3] sm:$0xff]
    %v162 = vld [vmem:[%s3 + $0x8] sm:$0xff]
    %v163 = vld [vmem:[%s3 + $0x10] sm:$0xff]
    %v164 = vld [vmem:[%s3 + $0x18] sm:$0xff]
    %v165 = vld [vmem:[%s4] sm:$0xff]
    %v166 = vld [vmem:[%s4 + $0x8] sm:$0xff]
    %v167 = vld [vmem:[%s4 + $0x10] sm:$0xff]
    %v168 = vld [vmem:[%s4 + $0x18] sm:$0xff]
    %170 = vset.pattern.permute.xlu0 0
    %171 = vperm.xlu0 %170, %v165
    %v172 = vpop.permute.xlu0 %171
    %175 = vset.pattern.permute.xlu0 0
    %176 = vperm.xlu0 %175, %v166
    %v177 = vpop.permute.xlu0 %176
    %180 = vset.pattern.permute.xlu0 0
    %181 = vperm.xlu0 %180, %v167
    %v182 = vpop.permute.xlu0 %181
    %185 = vset.pattern.permute.xlu0 0
    %186 = vperm.xlu0 %185, %v168
    %v187 = vpop.permute.xlu0 %186
    %vm189 = vcmask 261120
    %v191 = vsel %vm189, %v161, 0
    %v194 = vsel %vm189, %v162, 0
    %v197 = vsel %vm189, %v163, 0
    %v200 = vsel %vm189, %v164, 0
    %202 = vmatprep.subr.mxu0 0.0
    %203 = vmatpush1.msra.mxu0 0.0
    %204 = vmatprep.subr.mxu0 0.0
    %205 = vmatpush1.msra.mxu0 0.0
    %206 = vmatprep.subr.mxu0 0.0
    %207 = vmatpush1.msra.mxu0 0.0
    %208 = vmatprep.subr.mxu0 0.0
    %209 = vmatpush1.msra.mxu0 0.0
    %210 = vmatprep.subr.mxu0 0.0
    %211 = vmatpush1.msra.mxu0 0.0
    %212 = vmatprep.subr.mxu0 0.0
    %213 = vmatpush1.msra.mxu0 0.0
    %214 = vmatprep.subr.mxu0 0.0
    %215 = vmatpush1.msra.mxu0 0.0
    %216 = vmatprep.subr.mxu0 0.0
    %217 = vmatpush1.msra.mxu0 0.0
    %218 = vmatprep.subr.mxu0 0.0
    %219 = vmatpush1.msra.mxu0 0.0
    %220 = vmatprep.subr.mxu0 0.0
    %221 = vmatpush1.msra.mxu0 0.0
    %222 = vmatprep.subr.mxu0 0.0
    %223 = vmatpush1.msra.mxu0 0.0
    %224 = vmatprep.subr.mxu0 0.0
    %225 = vmatpush1.msra.mxu0 0.0
    %226 = vmatprep.subr.mxu0 0.0
    %227 = vmatpush1.msra.mxu0 %v160
    %228 = vmatprep.subr.mxu0 0.0
    %229 = vmatpush1.msra.mxu0 %v159
    %230 = vmatprep.subr.mxu0 0.0
    %231 = vmatpush1.msra.mxu0 %v158
    %232 = vmatprep.subr.mxu0 0.0
    %233 = vmatpush1.msra.mxu0 %v157
    %234 = vmatprep.subr.mxu0 0.0
    %235 = vmatpush2.msra.mxu0 0.0
    %236 = vmatprep.subr.mxu0 0.0
    %237 = vmatpush2.msra.mxu0 0.0
    %238 = vmatprep.subr.mxu0 0.0
    %239 = vmatpush2.msra.mxu0 0.0
    %240 = vmatprep.subr.mxu0 0.0
    %241 = vmatpush2.msra.mxu0 0.0
    %242 = vmatprep.subr.mxu0 0.0
    %243 = vmatpush2.msra.mxu0 0.0
    %244 = vmatprep.subr.mxu0 0.0
    %245 = vmatpush2.msra.mxu0 0.0
    %246 = vmatprep.subr.mxu0 0.0
    %247 = vmatpush2.msra.mxu0 0.0
    %248 = vmatprep.subr.mxu0 0.0
    %249 = vmatpush2.msra.mxu0 0.0
    %250 = vmatprep.subr.mxu0 0.0
    %251 = vmatpush2.msra.mxu0 0.0
    %252 = vmatprep.subr.mxu0 0.0
    %253 = vmatpush2.msra.mxu0 0.0
    %254 = vmatprep.subr.mxu0 0.0
    %255 = vmatpush2.msra.mxu0 0.0
    %256 = vmatprep.subr.mxu0 0.0
    %257 = vmatpush2.msra.mxu0 0.0
    %258 = vmatprep.subr.mxu0 0.0
    %259 = vmatpush2.msra.mxu0 0.0
    %260 = vmatprep.subr.mxu0 0.0
    %261 = vmatpush2.msra.mxu0 0.0
    %262 = vmatprep.subr.mxu0 0.0
    %263 = vmatpush2.msra.mxu0 0.0
    %264 = vmatprep.subr.mxu0 0.0
    %265 = vmatpush2.msra.mxu0 0.0
    %266 = vmatprep.mubr.f32.mxu0 0.0
    %267 = vmatmul.mubr.f32.gmra.mxu0 %v191
    %v268 = vpop.f32.mrf.mxu0
    %v269 = vadd.f32 %v172, %v268
    %v270 = vpop.f32.mrf.mxu0
    %271 = vmatprep.mubr.f32.mxu0 0.0
    %272 = vmatmul.mubr.f32.gmra.mxu0 %v194
    %v273 = vpop.f32.mrf.mxu0
    %v274 = vadd.f32 %v177, %v273
    %v275 = vpop.f32.mrf.mxu0
    %276 = vmatprep.mubr.f32.mxu0 0.0
    %277 = vmatmul.mubr.f32.gmra.mxu0 %v197
    %v278 = vpop.f32.mrf.mxu0
    %v279 = vadd.f32 %v182, %v278
    %v280 = vpop.f32.mrf.mxu0
    %281 = vmatprep.mubr.f32.mxu0 0.0
    %282 = vmatmul.mubr.f32.gmra.mxu0 %v200
    %v283 = vpop.f32.mrf.mxu0
    %v284 = vadd.f32 %v187, %v283
    %v285 = vpop.f32.mrf.mxu0
    %286 = vdwg.mxu0
    %v287 = vtanh.pop %v269
    %v288 = vtanh.pop %v274
    %v289 = vtanh.pop %v279
    %v290 = vtanh.pop %v284
    %v291 = vld [vmem:[%s5] sm:$0xff]
    %v292 = vld [vmem:[%s5 + $0x8] sm:$0xff]
    %v293 = vld [vmem:[%s5 + $0x10] sm:$0xff]
    %v294 = vld [vmem:[%s5 + $0x18] sm:$0xff]
    %v295 = vld [vmem:[#allocation2] sm:$0x1]
    %297 = vset.pattern.permute.xlu0 0
    %298 = vperm.xlu0 %297, %v291
    %v299 = vpop.permute.xlu0 %298
    %302 = vset.pattern.permute.xlu0 0
    %303 = vperm.xlu0 %302, %v292
    %v304 = vpop.permute.xlu0 %303
    %307 = vset.pattern.permute.xlu0 0
    %308 = vperm.xlu0 %307, %v293
    %v309 = vpop.permute.xlu0 %308
    %312 = vset.pattern.permute.xlu0 0
    %313 = vperm.xlu0 %312, %v294
    %v314 = vpop.permute.xlu0 %313
    %v316 = vmul.f32 %v287, %v299
    %v317 = vmul.f32 %v288, %v304
    %v318 = vmul.f32 %v289, %v309
    %v319 = vmul.f32 %v290, %v314
    %v320 = vadd.f32 %v316, %v317
    %v321 = vadd.f32 %v320, %v318
    %v322 = vadd.f32 %v321, %v319
    %v323 = vrot.slane %v322, 4
    %v324 = vadd.f32 %v322, %v323
    %v325 = vrot.slane %v324, 2
    %v326 = vadd.f32 %v324, %v325
    %v327 = vrot.slane %v326, 1
    %v328 = vadd.f32 %v326, %v327
    %330 = vset.pattern.permute.xlu0 0
    %331 = vperm.xlu0 %330, %v295
    %v332 = vpop.permute.xlu0 %331
    %v334 = vlaneseq
    %v335 = vshrl.u32 %v334, 7
    %v336 = vsub.s32 0, %v335
    %v337 = vrot.slane %v332, %v336
    %v338 = vadd.f32 %v328, %v337
    %339 = vst [vmem:[#allocation3] sm:$0x1] %v338
    // Predicated region
    $region30: #{tpu_custom_call.1} parent=1 // pred_check
      _
    $region31: #{tpu_custom_call.1} parent=1 // pred_check_branch
      %341 = sbr.rel (0) target = $region33
    $region32: #{tpu_custom_call.1} parent=1 // pred_region
      %s343 = ssub.s32 16, 16
      %344 = vsyncadd [#allocation4], %s343
      %s346 = sshll.u32 [#allocation3], 4
      %s347 = int_to_ptr.vmem [resolvable:$true] %s346
      %349 = dma.vmem_to_hbm [thread:$0]  %s347, 16, %s7, [#allocation4]
    $region33: #{tpu_custom_call.1} parent=1 // pred_fallthru
      _
    // Predicated region
    $region34: #{tpu_custom_call.1} parent=1 // pred_check
      _
    $region35: #{tpu_custom_call.1} parent=1 // pred_check_branch
      %351 = sbr.rel (0) target = $region37
    $region36: #{tpu_custom_call.1} parent=1 // pred_region
      %352 = dma.done [#allocation4], 16
    $region37: #{tpu_custom_call.1} parent=1 // pred_fallthru
      _
    %353 = vsyncpa [#allocation4], 1

</llo_original>
